<compile_context>
chip_gen: v7x
topology: tpu7x:2x2x1
jax: 0.10.0
libtpu: 0.0.40
codegen_flags: <defaults>
</compile_context>

<pallas_src>
import jax
import jax.numpy as jnp
from jax.experimental import pallas as pl
from jax.experimental.pallas import tpu as pltpu


def _round_up(x, m):
    return ((x + m - 1) // m) * m


def _pick_tile(dim, target, align):
    """Largest `align`-aligned tile <= target, preferring low padding waste."""
    dim_p = _round_up(dim, align)
    if dim_p <= target:
        return dim_p  # whole (padded) dimension fits in one tile
    best, best_waste = target, _round_up(dim, target) - dim
    t = target
    while t > align:
        t = max(align, _round_up(t // 2, align))
        waste = _round_up(dim, t) - dim
        if waste < best_waste:
            best, best_waste = t, waste
    return best


def _mlp_kernel_direct(x_ref, w_ref, ba_ref, o_ref):
    """f32 output: accumulate straight into the resident output tile."""
    k = pl.program_id(2)

    @pl.when(k == 0)
    def _init():
        o_ref[...] = jnp.zeros_like(o_ref)

    # Hot path: pure MXU accumulate (bf16 operands, f32 accumulation).
    o_ref[...] += jnp.dot(x_ref[...], w_ref[...],
                          preferred_element_type=jnp.float32)

    @pl.when(k == pl.num_programs(2) - 1)
    def _epilogue():
        bias = ba_ref[0:1, :]                  # (1, tn)
        alpha = ba_ref[1:2, :]                 # (1, tn) per-channel PReLU slope
        z = o_ref[...] + bias
        o_ref[...] = jnp.where(z > 0.0, z, alpha * z)


def _mlp_kernel_scratch(x_ref, w_ref, ba_ref, o_ref, acc_ref):
    """Narrow output dtype: f32 scratch accumulator, cast in the epilogue."""
    k = pl.program_id(2)

    @pl.when(k == 0)
    def _init():
        acc_ref[...] = jnp.zeros_like(acc_ref)

    acc_ref[...] += jnp.dot(x_ref[...], w_ref[...],
                            preferred_element_type=jnp.float32)

    @pl.when(k == pl.num_programs(2) - 1)
    def _epilogue():
        bias = ba_ref[0:1, :]
        alpha = ba_ref[1:2, :]
        z = acc_ref[...] + bias
        o_ref[...] = jnp.where(z > 0.0, z, alpha * z).astype(o_ref.dtype)


def mlp_forward(x, w_t, b, alpha, *, tm=512, tn=512, tk=1024,
                compute_dtype=jnp.bfloat16, out_dtype=jnp.float32):
    """x: (N, F); w_t: (F, O) (transpose of torch Linear weight); b, alpha: (O,).
    Returns PReLU(x @ w_t + b) with per-channel alpha, shape (N, O).

    Note: matmul operands are cast to `compute_dtype` (bf16 by default, f32
    accumulation). For very large F where bf16 rounding matters, pass
    compute_dtype=jnp.float32."""
    N, F = x.shape
    Fw, O = w_t.shape
    assert Fw == F

    # Adaptive, lane/sublane-aligned tile sizes.
    tm = _pick_tile(N, tm, 8)
    tn = _pick_tile(O, tn, 128)
    tk = _pick_tile(F, tk, 128)

    Np = _round_up(N, tm)
    # v7x has 2 TensorCores sharding the "parallel" grid axes: if the M axis
    # has a single block, split the N axis so both cores get work.
    if Np // tm == 1:
        while tn > 128 and _round_up(O, tn) // tn < 2:
            tn = max(128, _round_up(tn // 2, 128))
    Fp = _round_up(F, tk)
    Op = _round_up(O, tn)

    def _prep(a, shape, dtype):
        # Fast path: no copy when already in compute dtype and tile-aligned
        # (callers should pre-cast W once; it is reused every call).
        if a.dtype != dtype:
            a = a.astype(dtype)
        if a.shape != shape:
            a = jnp.pad(a, [(0, s - d) for s, d in zip(shape, a.shape)])
        return a

    x_p = _prep(x, (Np, Fp), compute_dtype)
    w_p = _prep(w_t, (Fp, Op), compute_dtype)

    # Pack bias + PReLU alpha into one lane-aligned (2, Op) f32 slab.
    ba = jnp.stack([b.astype(jnp.float32), alpha.astype(jnp.float32)])
    if Op != O:
        ba = jnp.pad(ba, ((0, 0), (0, Op - O)))

    grid = (Np // tm, Op // tn, Fp // tk)  # K (reduction) axis last

    use_scratch = jnp.dtype(out_dtype) != jnp.dtype(jnp.float32)
    kernel = _mlp_kernel_scratch if use_scratch else _mlp_kernel_direct
    scratch = [pltpu.VMEM((tm, tn), jnp.float32)] if use_scratch else []

    in_isz = jnp.dtype(compute_dtype).itemsize
    out_isz = jnp.dtype(out_dtype).itemsize
    # Double-buffered operand/out tiles (+ optional f32 acc); cap for v7x's
    # 64 MiB/TC VMEM while leaving pipelining headroom.
    vmem_bytes = (2 * tm * tk * in_isz + 2 * tk * tn * in_isz
                  + 2 * tm * tn * out_isz + 2 * 2 * tn * 4
                  + (tm * tn * 4 if use_scratch else 0))
    vmem_limit = int(min(max(2 * vmem_bytes, 16 * 1024 * 1024),
                         48 * 1024 * 1024))

    cost = pl.CostEstimate(
        flops=2 * Np * Fp * Op,
        transcendentals=0,
        bytes_accessed=(Np * Fp * in_isz * (Op // tn)       # x re-read per j
                        + Fp * Op * in_isz * (Np // tm)     # w re-read per i
                        + Np * Op * out_isz + 2 * Op * 4),
    )

    out_p = pl.pallas_call(
        kernel,
        out_shape=jax.ShapeDtypeStruct((Np, Op), out_dtype),
        grid_spec=pltpu.PrefetchScalarGridSpec(
            num_scalar_prefetch=0,
            grid=grid,
            in_specs=[
                pl.BlockSpec((tm, tk), lambda i, j, k: (i, k)),   # x tile
                pl.BlockSpec((tk, tn), lambda i, j, k: (k, j)),   # w tile
                pl.BlockSpec((2, tn), lambda i, j, k: (0, j)),    # [bias; alpha]
            ],
            out_specs=pl.BlockSpec((tm, tn), lambda i, j, k: (i, j)),
            scratch_shapes=scratch,
        ),
        compiler_params=pltpu.CompilerParams(
            dimension_semantics=("parallel", "parallel", "arbitrary"),
            vmem_limit_bytes=vmem_limit,
        ),
        cost_estimate=cost,
    )(x_p, w_p, ba)

    if (Np, Op) != (N, O):
        out_p = out_p[:N, :O]
    return out_p


if __name__ == "__main__":
    # Shapes implied by the module: x (batch, num_features) -> (batch, output).
    batch, num_features, output = 8, 32, 16

    key = jax.random.PRNGKey(0)
    kx, kw, kb, ka = jax.random.split(key, 4)

    x = jax.random.normal(kx, (batch, num_features), dtype=jnp.float32)
    # PyTorch Linear weight is (output, num_features); feed its transpose.
    w = jax.random.normal(kw, (output, num_features), dtype=jnp.float32) * 0.1
    b = jax.random.normal(kb, (output,), dtype=jnp.float32) * 0.1
    # PyTorch PReLU(output) default init = 0.25 per channel; perturb slightly
    # so the per-channel broadcast is actually exercised.
    alpha = 0.25 + 0.01 * jax.random.normal(ka, (output,), dtype=jnp.float32)

    out = mlp_forward(x, w.T, b, alpha)
    out = jax.block_until_ready(out)

    # Reference in plain JAX (same math as torch Linear + PReLU), f32.
    z_ref = x @ w.T + b
    ref = jnp.where(z_ref > 0.0, z_ref, alpha * z_ref)
    assert out.shape == (batch, output)
    assert out.dtype == jnp.float32
    # bf16 matmul inputs (f32 accumulation) -> loosened tolerance vs f32 ref.
    assert jnp.allclose(out, ref, atol=2e-2, rtol=2e-2)

    print("KERNEL_OK")
</pallas_src>

<mosaic_0001>
module attributes {stable_mosaic.version = 11 : i64} {
  func.func @_mlp_kernel_direct(%arg0: i32, %arg1: i32, %arg2: i32, %arg3: memref<8x128xbf16, #tpu.memory_space<vmem>>, %arg4: memref<128x128xbf16, #tpu.memory_space<vmem>>, %arg5: memref<2x128xf32, #tpu.memory_space<vmem>>, %arg6: memref<8x128xf32, #tpu.memory_space<vmem>>) attributes {dimension_semantics = [#tpu.dimension_semantics<parallel>, #tpu.dimension_semantics<parallel>, #tpu.dimension_semantics<arbitrary>], iteration_bounds = array<i64: 1, 1, 1>, scalar_prefetch = 0 : i64, scratch_operands = 0 : i64, tpu.core_type = #tpu.core_type<tc>, window_params = [{transform_indices = @transform_0, window_bounds = array<i64: 8, 128>}, {transform_indices = @transform_1, window_bounds = array<i64: 128, 128>}, {transform_indices = @transform_2, window_bounds = array<i64: 2, 128>}, {transform_indices = @transform_3, window_bounds = array<i64: 8, 128>}]} {
    %c0_i32 = arith.constant 0 : i32
    %0 = arith.cmpi eq, %arg2, %c0_i32 : i32
    %1 = arith.extui %0 : i1 to i32
    %c0_i32_0 = arith.constant 0 : i32
    %2 = arith.cmpi ne, %1, %c0_i32_0 : i32
    scf.if %2 {
      %cst_10 = arith.constant 0.000000e+00 : f32
      %12 = vector.broadcast %cst_10 : f32 to vector<8x128xf32>
      %c0_11 = arith.constant 0 : index
      %c0_12 = arith.constant 0 : index
      %13 = vector.load %arg6[%c0_11, %c0_12] : memref<8x128xf32, #tpu.memory_space<vmem>>, vector<8x128xf32>
      tpu.vector_store %arg6[%c0_11, %c0_12], %12 {strides = array<i32>} : memref<8x128xf32, #tpu.memory_space<vmem>>, vector<8x128xf32>,
    } else {
    }
    %c0 = arith.constant 0 : index
    %c0_1 = arith.constant 0 : index
    %3 = vector.load %arg6[%c0, %c0_1] : memref<8x128xf32, #tpu.memory_space<vmem>>, vector<8x128xf32>
    %c0_2 = arith.constant 0 : index
    %c0_3 = arith.constant 0 : index
    %4 = vector.load %arg3[%c0_2, %c0_3] : memref<8x128xbf16, #tpu.memory_space<vmem>>, vector<8x128xbf16>
    %c0_4 = arith.constant 0 : index
    %c0_5 = arith.constant 0 : index
    %5 = vector.load %arg4[%c0_4, %c0_5] : memref<128x128xbf16, #tpu.memory_space<vmem>>, vector<128x128xbf16>
    %cst = arith.constant dense<0.000000e+00> : vector<8x128xf32>
    %6 = tpu.matmul %4, %5, %cst {dimension_numbers = #tpu.dot_dimension_numbers<[1], [0], [0], [1], [0, 0, 1, 1], [], []>} : vector<8x128xbf16>, vector<128x128xbf16>, vector<8x128xf32> -> vector<8x128xf32>
    %7 = arith.addf %3, %6 : vector<8x128xf32>
    %c0_6 = arith.constant 0 : index
    %c0_7 = arith.constant 0 : index
    %8 = vector.load %arg6[%c0_6, %c0_7] : memref<8x128xf32, #tpu.memory_space<vmem>>, vector<8x128xf32>
    tpu.vector_store %arg6[%c0_6, %c0_7], %7 {strides = array<i32>} : memref<8x128xf32, #tpu.memory_space<vmem>>, vector<8x128xf32>,
    %c0_i32_8 = arith.constant 0 : i32
    %9 = arith.cmpi eq, %arg2, %c0_i32_8 : i32
    %10 = arith.extui %9 : i1 to i32
    %c0_i32_9 = arith.constant 0 : i32
    %11 = arith.cmpi ne, %10, %c0_i32_9 : i32
    scf.if %11 {
      %c0_10 = arith.constant 0 : index
      %c0_11 = arith.constant 0 : index
      %12 = vector.load %arg5[%c0_10, %c0_11] : memref<2x128xf32, #tpu.memory_space<vmem>>, vector<1x128xf32>
      %c1 = arith.constant 1 : index
      %c0_12 = arith.constant 0 : index
      %13 = vector.load %arg5[%c1, %c0_12] : memref<2x128xf32, #tpu.memory_space<vmem>>, vector<1x128xf32>
      %c0_13 = arith.constant 0 : index
      %c0_14 = arith.constant 0 : index
      %14 = vector.load %arg6[%c0_13, %c0_14] : memref<8x128xf32, #tpu.memory_space<vmem>>, vector<8x128xf32>
      %15 = vector.broadcast %12 : vector<1x128xf32> to vector<8x128xf32>
      %16 = arith.addf %14, %15 : vector<8x128xf32>
      %cst_15 = arith.constant 0.000000e+00 : f32
      %17 = vector.broadcast %cst_15 : f32 to vector<8x128xf32>
      %18 = arith.cmpf ogt, %16, %17 : vector<8x128xf32>
      %19 = vector.broadcast %13 : vector<1x128xf32> to vector<8x128xf32>
      %20 = arith.mulf %19, %16 : vector<8x128xf32>
      %21 = arith.select %18, %16, %20 : vector<8x128xi1>, vector<8x128xf32>
      %c0_16 = arith.constant 0 : index
      %c0_17 = arith.constant 0 : index
      %22 = vector.load %arg6[%c0_16, %c0_17] : memref<8x128xf32, #tpu.memory_space<vmem>>, vector<8x128xf32>
      tpu.vector_store %arg6[%c0_16, %c0_17], %21 {strides = array<i32>} : memref<8x128xf32, #tpu.memory_space<vmem>>, vector<8x128xf32>,
    } else {
    }
    return
  }
  func.func @transform_0(%arg0: i32, %arg1: i32, %arg2: i32) -> (i32, i32) {
    %c0_i32 = arith.constant 0 : i32
    return %arg0, %arg2 : i32, i32
  }
  func.func @transform_1(%arg0: i32, %arg1: i32, %arg2: i32) -> (i32, i32) {
    %c0_i32 = arith.constant 0 : i32
    return %arg2, %arg1 : i32, i32
  }
  func.func @transform_2(%arg0: i32, %arg1: i32, %arg2: i32) -> (i32, i32) {
    %c0_i32 = arith.constant 0 : i32
    %c0_i32_0 = arith.constant 0 : i32
    return %c0_i32, %arg1 : i32, i32
  }
  func.func @transform_3(%arg0: i32, %arg1: i32, %arg2: i32) -> (i32, i32) {
    %c0_i32 = arith.constant 0 : i32
    return %arg0, %arg1 : i32, i32
  }
}

</mosaic_0001>

<llo_original>
// kernel: tpu_custom_call.1
$region0: #{tpu_custom_call.1}
  #allocation0 [shape = 'u32[]', space=smem, size = 0x4, offset = 0x4, fixed_abs, tag = 'smem constant byte address 0x4 - core index']
  #allocation1 [shape = 'u32[144,128]{1,0:T(1,128)}', space=vmem, size = 0x12000, scoped, tag = 'internal scratch']
  %s0 = inlined_call_operand.hbm [shape: bf16[8,128], index: 0, kind: input, shape index: {}]
  %s1 = inlined_call_operand.hbm [shape: bf16[128,128], index: 1, kind: input, shape index: {}]
  %s2 = inlined_call_operand.vmem [shape: f32[2,128], index: 2, kind: input, shape index: {}]
  %s3 = inlined_call_operand.hbm [shape: f32[8,128], index: 3, kind: output, shape index: {}]
  %s4 = sld [smem:[#allocation0]]
  $region38: #{tpu_custom_call.1} parent=0
    _
  %s6 = ssub.s32 1, %s4
  %s7 = scalar_select 0, %s6, %s4
  $region1: #{tpu_custom_call.1} parent=0
    #allocation2 [shape = 'u8[2048]{0}', space=vmem, size = 0x800, scoped, tag = 'input window, operand 0, single buffered']
    #allocation3 [shape = 's32[1]{0}', space=sflag, size = 0x4, scoped, tag = 'scoped memory for tpu_custom_call.1']
    #allocation4 [shape = 's32[1]{0}', space=sflag, size = 0x4, scoped, tag = 'scoped memory for tpu_custom_call.1']
    #allocation5 [shape = 'u8[32768]{0}', space=vmem, size = 0x8000, scoped, tag = 'input window, operand 1, single buffered']
    #allocation6 [shape = 's32[1]{0}', space=sflag, size = 0x4, scoped, tag = 'scoped memory for tpu_custom_call.1']
    #allocation7 [shape = 'u8[4096]{0}', space=vmem, size = 0x1000, scoped, tag = 'output window, operand 0, single buffered']
    %8 = vsyncpa [#allocation3], 0
    %9 = vsyncpa [#allocation6], 0
    %10 = vsyncpa [#allocation4], 0
    // Predicated region
    $region2: #{tpu_custom_call.1} parent=1 // pred_check
      _
    $region3: #{tpu_custom_call.1} parent=1 // pred_check_branch
      %12 = sbr.rel (0) target = $region5
    $region4: #{tpu_custom_call.1} parent=1 // pred_region
      %s14 = ssub.s32 64, 64
      %15 = vsyncadd [#allocation3], %s14
      %s17 = sshll.u32 [#allocation2], 4
      %s18 = int_to_ptr.vmem [resolvable:$true] %s17
      %20 = dma.hbm_to_vmem [thread:$0]  %s0, 64, %s18, [#allocation3]
    $region5: #{tpu_custom_call.1} parent=1 // pred_fallthru
      _
    // Predicated region
    $region6: #{tpu_custom_call.1} parent=1 // pred_check
      _
    $region7: #{tpu_custom_call.1} parent=1 // pred_check_branch
      %22 = sbr.rel (0) target = $region9
    $region8: #{tpu_custom_call.1} parent=1 // pred_region
      %s24 = ssub.s32 1024, 1024
      %25 = vsyncadd [#allocation6], %s24
      %s26 = sshll.u32 [#allocation5], 4
      %s27 = int_to_ptr.vmem [resolvable:$true] %s26
      %32 = dma.hbm_to_vmem [thread:$0]  %s1, 1024, %s27, [#allocation6], 64, 64, 4
    $region9: #{tpu_custom_call.1} parent=1 // pred_fallthru
      _
    // Predicated region
    $region10: #{tpu_custom_call.1} parent=1 // pred_check
      _
    $region11: #{tpu_custom_call.1} parent=1 // pred_check_branch
      %34 = sbr.rel (0) target = $region13
    $region12: #{tpu_custom_call.1} parent=1 // pred_region
      _
    $region13: #{tpu_custom_call.1} parent=1 // pred_fallthru
      _
    // Predicated region
    $region14: #{tpu_custom_call.1} parent=1 // pred_check
      _
    $region15: #{tpu_custom_call.1} parent=1 // pred_check_branch
      %36 = sbr.rel (0) target = $region17
    $region16: #{tpu_custom_call.1} parent=1 // pred_region
      %37 = dma.done [#allocation3], 64
    $region17: #{tpu_custom_call.1} parent=1 // pred_fallthru
      _
    // Predicated region
    $region18: #{tpu_custom_call.1} parent=1 // pred_check
      _
    $region19: #{tpu_custom_call.1} parent=1 // pred_check_branch
      %39 = sbr.rel (0) target = $region21
    $region20: #{tpu_custom_call.1} parent=1 // pred_region
      %40 = dma.done [#allocation6], 1024
    $region21: #{tpu_custom_call.1} parent=1 // pred_fallthru
      _
    %p42 = scmp.eq.s32.totalorder 0, 0
    // Predicated region
    $region22: #{tpu_custom_call.1} parent=1 // pred_check
      %p43 = pneg %p42
    $region23: #{tpu_custom_call.1} parent=1 // pred_check_branch
      %45 = sbr.rel (%p43) target = $region25
    $region24: #{tpu_custom_call.1} parent=1 // pred_region
      %46 = vst [vmem:[#allocation7] sm:$0xff] 0.0
    $region25: #{tpu_custom_call.1} parent=1 // pred_fallthru
      _
    %v47 = vld [vmem:[#allocation7] sm:$0xff]
    %v48 = vld [vmem:[#allocation2] sm:$0xf]
    %v49 = vld [vmem:[#allocation5] sm:$0xf]
    %v50 = vld [vmem:[#allocation5 + $0x4] sm:$0xf]
    %v51 = vld [vmem:[#allocation5 + $0x8] sm:$0xf]
    %v52 = vld [vmem:[#allocation5 + $0xc] sm:$0xf]
    %v53 = vld [vmem:[#allocation5 + $0x10] sm:$0xf]
    %v54 = vld [vmem:[#allocation5 + $0x14] sm:$0xf]
    %v55 = vld [vmem:[#allocation5 + $0x18] sm:$0xf]
    %v56 = vld [vmem:[#allocation5 + $0x1c] sm:$0xf]
    %v57 = vld [vmem:[#allocation5 + $0x20] sm:$0xf]
    %v58 = vld [vmem:[#allocation5 + $0x24] sm:$0xf]
    %v59 = vld [vmem:[#allocation5 + $0x28] sm:$0xf]
    %v60 = vld [vmem:[#allocation5 + $0x2c] sm:$0xf]
    %v61 = vld [vmem:[#allocation5 + $0x30] sm:$0xf]
    %v62 = vld [vmem:[#allocation5 + $0x34] sm:$0xf]
    %v63 = vld [vmem:[#allocation5 + $0x38] sm:$0xf]
    %v64 = vld [vmem:[#allocation5 + $0x3c] sm:$0xf]
    %v81 = vunpack.c.l.b16 %v49
    %v82 = vunpack.c.l.b16 %v50
    %v83 = vunpack.c.l.b16 %v51
    %v84 = vunpack.c.l.b16 %v52
    %v85 = vunpack.c.l.b16 %v53
    %v86 = vunpack.c.l.b16 %v54
    %v87 = vunpack.c.l.b16 %v55
    %v88 = vunpack.c.l.b16 %v56
    %v89 = vunpack.c.l.b16 %v57
    %v90 = vunpack.c.l.b16 %v58
    %v91 = vunpack.c.l.b16 %v59
    %v92 = vunpack.c.l.b16 %v60
    %v93 = vunpack.c.l.b16 %v61
    %v94 = vunpack.c.l.b16 %v62
    %v95 = vunpack.c.l.b16 %v63
    %v96 = vunpack.c.l.b16 %v64
    %v97 = vpack.c.b16 %v82, %v81
    %v98 = vpack.c.b16 %v84, %v83
    %v99 = vpack.c.b16 %v86, %v85
    %v100 = vpack.c.b16 %v88, %v87
    %v101 = vpack.c.b16 %v90, %v89
    %v102 = vpack.c.b16 %v92, %v91
    %v103 = vpack.c.b16 %v94, %v93
    %v104 = vpack.c.b16 %v96, %v95
    %113 = vmatprep.subr.bf16.mxu0 0
    %114 = vmatpush1.bf16.msra.mxu0 %v97
    %115 = vmatprep.subr.bf16.mxu0 0
    %116 = vmatpush1.bf16.msra.mxu0 %v98
    %117 = vmatprep.subr.bf16.mxu0 0
    %118 = vmatpush1.bf16.msra.mxu0 %v99
    %119 = vmatprep.subr.bf16.mxu0 0
    %120 = vmatpush1.bf16.msra.mxu0 %v100
    %121 = vmatprep.subr.bf16.mxu0 0
    %122 = vmatpush1.bf16.msra.mxu0 %v101
    %123 = vmatprep.subr.bf16.mxu0 0
    %124 = vmatpush1.bf16.msra.mxu0 %v102
    %125 = vmatprep.subr.bf16.mxu0 0
    %126 = vmatpush1.bf16.msra.mxu0 %v103
    %127 = vmatprep.subr.bf16.mxu0 0
    %128 = vmatpush1.bf16.msra.mxu0 %v104
    %129 = vmatprep.subr.bf16.mxu0 0
    %130 = vmatpush1.bf16.msra.mxu0 0
    %131 = vmatprep.subr.bf16.mxu0 0
    %132 = vmatpush1.bf16.msra.mxu0 0
    %133 = vmatprep.subr.bf16.mxu0 0
    %134 = vmatpush1.bf16.msra.mxu0 0
    %135 = vmatprep.subr.bf16.mxu0 0
    %136 = vmatpush1.bf16.msra.mxu0 0
    %137 = vmatprep.subr.bf16.mxu0 0
    %138 = vmatpush1.bf16.msra.mxu0 0
    %139 = vmatprep.subr.bf16.mxu0 0
    %140 = vmatpush1.bf16.msra.mxu0 0
    %141 = vmatprep.subr.bf16.mxu0 0
    %142 = vmatpush1.bf16.msra.mxu0 0
    %143 = vmatprep.subr.bf16.mxu0 0
    %144 = vmatpush1.bf16.msra.mxu0 0
    %145 = vmatprep.mubr.bf16.mxu0 0
    %146 = vmatmul.mubr.bf16.gmra.mrb[0].mxu0 %v48
    %v147 = vpop.f32.mrb[0].mxu0
    %v148 = vadd.f32 0.0, %v147
    %v149 = vpop.f32.mrb[0].mxu0
    %v150 = vpop.f32.mrb[0].mxu0
    %v151 = vpop.f32.mrb[0].mxu0
    %152 = vdwg.mxu0
    %v153 = vadd.f32 %v47, %v148
    %154 = vst [vmem:[#allocation7] sm:$0xff] %v153
    // Predicated region
    $region26: #{tpu_custom_call.1} parent=1 // pred_check
      %p155 = pneg %p42
    $region27: #{tpu_custom_call.1} parent=1 // pred_check_branch
      %157 = sbr.rel (%p155) target = $region29
    $region28: #{tpu_custom_call.1} parent=1 // pred_region
      %v158 = vld [vmem:[%s2] sm:$0x1]
      %v159 = vld [vmem:[%s2 + $0x1] sm:$0x1]
      %v160 = vld [vmem:[#allocation7] sm:$0xff]
      %v161 = vlaneseq
      %v162 = vshrl.u32 %v161, 7
      %v163 = vsub.s32 0, %v162
      %v164 = vrot.slane %v158, %v163
      %v165 = vadd.f32 %v160, %v164
      %vm166 = vcmp.gt.f32.partialorder %v165, 0.0
      %v167 = vlaneseq
      %v168 = vshrl.u32 %v167, 7
      %v169 = vsub.s32 0, %v168
      %v170 = vrot.slane %v159, %v169
      %v171 = vmul.f32 %v170, %v165
      %v172 = vsel %vm166, %v165, %v171
      %173 = vst [vmem:[#allocation7] sm:$0xff] %v172
    $region29: #{tpu_custom_call.1} parent=1 // pred_fallthru
      _
    // Predicated region
    $region30: #{tpu_custom_call.1} parent=1 // pred_check
      _
    $region31: #{tpu_custom_call.1} parent=1 // pred_check_branch
      %175 = sbr.rel (0) target = $region33
    $region32: #{tpu_custom_call.1} parent=1 // pred_region
      %s177 = ssub.s32 128, 128
      %178 = vsyncadd [#allocation4], %s177
      %s180 = sshll.u32 [#allocation7], 4
      %s181 = int_to_ptr.vmem [resolvable:$true] %s180
      %183 = dma.vmem_to_hbm [thread:$0]  %s181, 128, %s3, [#allocation4]
    $region33: #{tpu_custom_call.1} parent=1 // pred_fallthru
      _
    // Predicated region
    $region34: #{tpu_custom_call.1} parent=1 // pred_check
      _
    $region35: #{tpu_custom_call.1} parent=1 // pred_check_branch
      %185 = sbr.rel (0) target = $region37
    $region36: #{tpu_custom_call.1} parent=1 // pred_region
      %186 = dma.done [#allocation4], 128
    $region37: #{tpu_custom_call.1} parent=1 // pred_fallthru
      _
    %187 = vsyncpa [#allocation3], 1
    %188 = vsyncpa [#allocation6], 1
    %189 = vsyncpa [#allocation4], 1

</llo_original>
